<compile_context>
chip_gen: v5e
topology: v5e:2x2
jax: 0.10.0
libtpu: 0.0.40
codegen_flags: <defaults>
</compile_context>

<pallas_src>
import jax
import jax.numpy as jnp
from jax import lax
from jax.experimental import pallas as pl
from jax.experimental.pallas import tpu as pltpu


def _classifier_kernel(x_ref, w1_ref, b1_ref, w2_ref, b2_ref, o_ref):
    # x_ref:  (TILE_B, D) VMEM        w1_ref: (2, D) VMEM (PyTorch (out,in) layout)
    # b1_ref: (2,) SMEM   w2_ref: (2,) SMEM   b2_ref: (1,) SMEM
    # o_ref:  (1, TILE_B) VMEM  -- batch on the lane axis (lane-dense store)
    x = x_ref[...]
    w1 = w1_ref[...]
    # fc1 on the MXU; contract D on both operands so the result lands with the
    # batch on lanes: (2, TILE_B).
    hT = lax.dot_general(w1, x, (((1,), (1,)), ((), ())),
                         preferred_element_type=jnp.float32)
    h0 = jnp.maximum(hT[0:1, :] + b1_ref[0], 0.0)     # ReLU, fc1 unit 0
    h1 = jnp.maximum(hT[1:2, :] + b1_ref[1], 0.0)     # ReLU, fc1 unit 1
    # fc2: a 2-term VPU weighted sum with SMEM scalars (no 1-lane MXU matmul).
    z = h0 * w2_ref[0] + h1 * w2_ref[1] + b2_ref[0]
    # Numerically-stable sigmoid (exp on the EUP, lane-dense (1, TILE_B) vregs).
    ez = jnp.exp(-jnp.abs(z))
    sig = jnp.where(z >= 0.0, 1.0 / (1.0 + ez), ez / (1.0 + ez))
    o_ref[...] = sig.astype(o_ref.dtype)


def _round_up(n, m):
    return ((n + m - 1) // m) * m


def _pick_tile_b(B, D):
    """Batch tile: sized by bytes (~4 MiB per x buffer, double-buffered by the
    pipeline), multiple of 128 so the lane-dense (1, tile_b) output block is
    legal, and capped so there are >= 2 grid steps when possible (v7x has two
    TensorCores that share the 'parallel' batch axis)."""
    if B <= 128:
        return B                                  # single block == full array
    per_buffer_budget = 4 * 1024 * 1024
    tile = max(128, (per_buffer_budget // (D * 4)) // 128 * 128)
    half = _round_up((B + 1) // 2, 128)           # prefer >= 2 grid steps
    return min(tile, max(128, half))


def binary_classifier_forward(x, w1, b1, w2, b2):
    """x: (B, H, W) -> (B, 1) float32. Weights use PyTorch layouts:
    w1 = fc1.weight (2, D), b1 (2,), w2 = fc2.weight (1, 2), b2 (1,)."""
    B = x.shape[0]
    D = x.shape[1] * x.shape[2]
    x_flat = x.reshape(B, D).astype(jnp.float32)        # nn.Flatten (free reshape)

    tile_b = _pick_tile_b(B, D)
    grid = (pl.cdiv(B, tile_b),)                        # ragged last block is masked

    w1_f = w1.reshape(2, D).astype(jnp.float32)         # lane-dense resident block
    b1_s = b1.reshape(2).astype(jnp.float32)            # SMEM scalars
    w2_s = w2.reshape(2).astype(jnp.float32)            # SMEM scalars
    b2_s = b2.reshape(1).astype(jnp.float32)            # SMEM scalar

    smem_spec = pl.BlockSpec(memory_space=pltpu.MemorySpace.SMEM)

    # VMEM footprint (double-buffered x / w1 / out, sublane-padded) + headroom;
    # generation-safe (never asks for v7x's entire 64 MiB).
    footprint = (2 * tile_b * D * 4          # x double buffer
                 + 2 * 8 * D * 4             # w1 (2,D) padded to (8,D), 2 buffers
                 + 2 * 8 * tile_b * 4        # out (1,tile_b) padded to (8,tile_b)
                 + (1 << 20))                # compiler scratch headroom
    vmem_limit = int(min(max(2 * footprint, 8 << 20), 32 << 20))

    cost = pl.CostEstimate(
        flops=4 * B * D + 8 * B,
        transcendentals=B,
        bytes_accessed=B * D * 4 + B * 4 + 2 * D * 4 + 5 * 4,
    )

    out = pl.pallas_call(
        _classifier_kernel,
        out_shape=jax.ShapeDtypeStruct((1, B), jnp.float32),
        grid_spec=pltpu.PrefetchScalarGridSpec(
            num_scalar_prefetch=0,
            grid=grid,
            in_specs=[
                pl.BlockSpec((tile_b, D), lambda i: (i, 0)),   # x: streamed per tile
                pl.BlockSpec((2, D), lambda i: (0, 0)),        # w1: resident VMEM
                smem_spec,                                     # b1 scalars
                smem_spec,                                     # w2 scalars
                smem_spec,                                     # b2 scalar
            ],
            out_specs=pl.BlockSpec((1, tile_b), lambda i: (0, i)),
        ),
        compiler_params=pltpu.CompilerParams(
            dimension_semantics=("parallel",),   # megacore sharding on v7x
            vmem_limit_bytes=vmem_limit,
        ),
        cost_estimate=cost,
    )(x_flat, w1_f, b1_s, w2_s, b2_s)

    return out.reshape(B, 1)                    # (1, B) -> (B, 1)


def init_params(key, in_features):
    """Deterministic init mirroring nn.Linear's default U(-1/sqrt(fan_in), ...),
    with PyTorch weight layouts (out_features, in_features)."""
    k1, k2, k3, k4 = jax.random.split(key, 4)
    bound1 = 1.0 / jnp.sqrt(in_features)
    w1 = jax.random.uniform(k1, (2, in_features), jnp.float32, -bound1, bound1)
    b1 = jax.random.uniform(k2, (2,), jnp.float32, -bound1, bound1)
    bound2 = 1.0 / jnp.sqrt(2.0)
    w2 = jax.random.uniform(k3, (1, 2), jnp.float32, -bound2, bound2)
    b2 = jax.random.uniform(k4, (1,), jnp.float32, -bound2, bound2)
    return w1, b1, w2, b2


def reference_forward(x, w1, b1, w2, b2):
    """Pure-JAX reference identical to the PyTorch forward (PyTorch layouts)."""
    B = x.shape[0]
    xf = x.reshape(B, -1)
    h = jnp.maximum(xf @ w1.T + b1, 0.0)
    z = h @ w2.T + b2
    return jax.nn.sigmoid(z)


if __name__ == "__main__":
    key = jax.random.PRNGKey(0)
    k_x, k_p = jax.random.split(key)

    # Small shapes consistent with the module: input_shape = (8, 16) -> D = 128
    B, H, W = 4, 8, 16
    x = jax.random.normal(k_x, (B, H, W), dtype=jnp.float32)
    w1, b1, w2, b2 = init_params(k_p, H * W)

    out = jax.block_until_ready(binary_classifier_forward(x, w1, b1, w2, b2))
    ref = reference_forward(x, w1, b1, w2, b2)
    assert out.shape == (B, 1)
    assert jnp.allclose(out, ref, atol=1e-5, rtol=1e-5)

    # Multi-tile path: grid = 2 with a ragged (masked) last block, no jnp.pad copy.
    B2 = 3000
    x2 = jax.random.normal(jax.random.PRNGKey(1), (B2, H, W), dtype=jnp.float32)
    out2 = jax.block_until_ready(binary_classifier_forward(x2, w1, b1, w2, b2))
    ref2 = reference_forward(x2, w1, b1, w2, b2)
    assert out2.shape == (B2, 1)
    assert jnp.allclose(out2, ref2, atol=1e-5, rtol=1e-5)

    print("KERNEL_OK")
</pallas_src>

<mosaic_0001>
module attributes {stable_mosaic.version = 11 : i64} {
  func.func @_classifier_kernel(%arg0: i32, %arg1: memref<4x128xf32, #tpu.memory_space<vmem>>, %arg2: memref<2x128xf32, #tpu.memory_space<vmem>>, %arg3: memref<2xf32, #tpu.memory_space<smem>>, %arg4: memref<2xf32, #tpu.memory_space<smem>>, %arg5: memref<1xf32, #tpu.memory_space<smem>>, %arg6: memref<1x4xf32, #tpu.memory_space<vmem>>) attributes {dimension_semantics = [#tpu.dimension_semantics<parallel>], iteration_bounds = array<i64: 1>, scalar_prefetch = 0 : i64, scratch_operands = 0 : i64, tpu.core_type = #tpu.core_type<tc>, window_params = [{transform_indices = @transform_0, window_bounds = array<i64: 4, 128>}, {pipeline_mode = #tpu.pipeline_mode<synchronous>, transform_indices = @transform_1, window_bounds = array<i64: 2, 128>}, {transform_indices = @transform_2, window_bounds = array<i64: 2>}, {transform_indices = @transform_3, window_bounds = array<i64: 2>}, {transform_indices = @transform_4, window_bounds = array<i64: 1>}, {transform_indices = @transform_5, window_bounds = array<i64: 1, 4>}]} {
    %c0 = arith.constant 0 : index
    %c0_0 = arith.constant 0 : index
    %0 = vector.load %arg1[%c0, %c0_0] : memref<4x128xf32, #tpu.memory_space<vmem>>, vector<4x128xf32>
    %c0_1 = arith.constant 0 : index
    %c0_2 = arith.constant 0 : index
    %1 = vector.load %arg2[%c0_1, %c0_2] : memref<2x128xf32, #tpu.memory_space<vmem>>, vector<2x128xf32>
    %cst = arith.constant dense<0.000000e+00> : vector<2x4xf32>
    %2 = tpu.matmul %1, %0, %cst {dimension_numbers = #tpu.dot_dimension_numbers<[1], [1], [0], [0], [0, 0, 1, 0], [], []>} : vector<2x128xf32>, vector<4x128xf32>, vector<2x4xf32> -> vector<2x4xf32>
    %3 = vector.extract_strided_slice %2 {offsets = [0, 0], sizes = [1, 4], strides = [1, 1]} : vector<2x4xf32> to vector<1x4xf32>
    %c0_3 = arith.constant 0 : index
    %4 = memref.load %arg3[%c0_3] : memref<2xf32, #tpu.memory_space<smem>>
    %5 = vector.broadcast %4 : f32 to vector<1x4xf32>
    %6 = arith.addf %3, %5 : vector<1x4xf32>
    %cst_4 = arith.constant 0.000000e+00 : f32
    %7 = vector.broadcast %cst_4 : f32 to vector<1x4xf32>
    %8 = arith.maximumf %6, %7 : vector<1x4xf32>
    %9 = vector.extract_strided_slice %2 {offsets = [1, 0], sizes = [1, 4], strides = [1, 1]} : vector<2x4xf32> to vector<1x4xf32>
    %c1 = arith.constant 1 : index
    %10 = memref.load %arg3[%c1] : memref<2xf32, #tpu.memory_space<smem>>
    %11 = vector.broadcast %10 : f32 to vector<1x4xf32>
    %12 = arith.addf %9, %11 : vector<1x4xf32>
    %cst_5 = arith.constant 0.000000e+00 : f32
    %13 = vector.broadcast %cst_5 : f32 to vector<1x4xf32>
    %14 = arith.maximumf %12, %13 : vector<1x4xf32>
    %c0_6 = arith.constant 0 : index
    %15 = memref.load %arg4[%c0_6] : memref<2xf32, #tpu.memory_space<smem>>
    %16 = vector.broadcast %15 : f32 to vector<1x4xf32>
    %17 = arith.mulf %8, %16 : vector<1x4xf32>
    %c1_7 = arith.constant 1 : index
    %18 = memref.load %arg4[%c1_7] : memref<2xf32, #tpu.memory_space<smem>>
    %19 = vector.broadcast %18 : f32 to vector<1x4xf32>
    %20 = arith.mulf %14, %19 : vector<1x4xf32>
    %21 = arith.addf %17, %20 : vector<1x4xf32>
    %c0_8 = arith.constant 0 : index
    %22 = memref.load %arg5[%c0_8] : memref<1xf32, #tpu.memory_space<smem>>
    %23 = vector.broadcast %22 : f32 to vector<1x4xf32>
    %24 = arith.addf %21, %23 : vector<1x4xf32>
    %25 = math.absf %24 : vector<1x4xf32>
    %cst_9 = arith.constant 0.000000e+00 : f32
    %26 = vector.broadcast %cst_9 : f32 to vector<1x4xf32>
    %27 = arith.subf %26, %25 : vector<1x4xf32>
    %28 = math.exp %27 : vector<1x4xf32>
    %cst_10 = arith.constant 0.000000e+00 : f32
    %29 = vector.broadcast %cst_10 : f32 to vector<1x4xf32>
    %30 = arith.cmpf oge, %24, %29 : vector<1x4xf32>
    %cst_11 = arith.constant 1.000000e+00 : f32
    %31 = vector.broadcast %cst_11 : f32 to vector<1x4xf32>
    %32 = arith.addf %31, %28 : vector<1x4xf32>
    %cst_12 = arith.constant 1.000000e+00 : f32
    %33 = vector.broadcast %cst_12 : f32 to vector<1x4xf32>
    %34 = arith.divf %33, %32 : vector<1x4xf32>
    %cst_13 = arith.constant 1.000000e+00 : f32
    %35 = vector.broadcast %cst_13 : f32 to vector<1x4xf32>
    %36 = arith.addf %35, %28 : vector<1x4xf32>
    %37 = arith.divf %28, %36 : vector<1x4xf32>
    %38 = arith.select %30, %34, %37 : vector<1x4xi1>, vector<1x4xf32>
    %c0_14 = arith.constant 0 : index
    %c0_15 = arith.constant 0 : index
    %39 = vector.load %arg6[%c0_14, %c0_15] : memref<1x4xf32, #tpu.memory_space<vmem>>, vector<1x4xf32>
    tpu.vector_store %arg6[%c0_14, %c0_15], %38 {strides = array<i32>} : memref<1x4xf32, #tpu.memory_space<vmem>>, vector<1x4xf32>,
    return
  }
  func.func @transform_0(%arg0: i32) -> (i32, i32) {
    %c0_i32 = arith.constant 0 : i32
    %c0_i32_0 = arith.constant 0 : i32
    return %arg0, %c0_i32 : i32, i32
  }
  func.func @transform_1(%arg0: i32) -> (i32, i32) {
    %c0_i32 = arith.constant 0 : i32
    %c0_i32_0 = arith.constant 0 : i32
    %c0_i32_1 = arith.constant 0 : i32
    return %c0_i32, %c0_i32_0 : i32, i32
  }
  func.func @transform_2(%arg0: i32) -> i32 {
    %c0_i32 = arith.constant 0 : i32
    %c0_i32_0 = arith.constant 0 : i32
    return %c0_i32 : i32
  }
  func.func @transform_3(%arg0: i32) -> i32 {
    %c0_i32 = arith.constant 0 : i32
    %c0_i32_0 = arith.constant 0 : i32
    return %c0_i32 : i32
  }
  func.func @transform_4(%arg0: i32) -> i32 {
    %c0_i32 = arith.constant 0 : i32
    %c0_i32_0 = arith.constant 0 : i32
    return %c0_i32 : i32
  }
  func.func @transform_5(%arg0: i32) -> (i32, i32) {
    %c0_i32 = arith.constant 0 : i32
    %c0_i32_0 = arith.constant 0 : i32
    return %c0_i32, %arg0 : i32, i32
  }
}

</mosaic_0001>

<llo_original>
// kernel: tpu_custom_call.1
$region0: #{tpu_custom_call.1}
  #allocation0 [shape = 'u32[]', space=smem, size = 0x4, offset = 0x4, fixed_abs, tag = 'smem constant byte address 0x4 - core index']
  #allocation1 [shape = 'u32[72,128]{1,0:T(1,128)}', space=vmem, size = 0x9000, scoped, tag = 'internal scratch']
  #allocation2 [shape = 'f32[1]{0:T(128)S(6)}', space=smem, size = 0x200, scoped, tag = 'scoped memory for tpu_custom_call.1']
  %s0 = inlined_call_operand.hbm [shape: f32[4,128], index: 0, kind: input, shape index: {}]
  %s1 = inlined_call_operand.vmem [shape: f32[2,128], index: 1, kind: input, shape index: {}]
  %s2 = inlined_call_operand.vmem [shape: f32[2], index: 2, kind: input, shape index: {}]
  %s3 = inlined_call_operand.vmem [shape: f32[2], index: 3, kind: input, shape index: {}]
  %s4 = inlined_call_operand.<no memory space> [shape: f32[1], index: 4, kind: input, shape index: {}]
  %s5 = inlined_call_operand.hbm [shape: f32[1,4], index: 5, kind: output, shape index: {}]
  %s6 = sld [smem:[#allocation0]]
  $region42: #{tpu_custom_call.1} parent=0
    _
  %s8 = ssub.s32 1, %s6
  %s9 = scalar_select 0, %s8, %s6
  %10 = sst [smem:[#allocation2]] %s4
  $region1: #{tpu_custom_call.1} parent=0
    #allocation3 [shape = 'u8[2048]{0}', space=vmem, size = 0x800, scoped, tag = 'input window, operand 0, single buffered']
    #allocation4 [shape = 's32[1]{0}', space=sflag, size = 0x4, scoped, tag = 'scoped memory for tpu_custom_call.1']
    #allocation5 [shape = 's32[1]{0}', space=sflag, size = 0x4, scoped, tag = 'scoped memory for tpu_custom_call.1']
    #allocation6 [shape = 's32[1]{0}', space=sflag, size = 0x4, scoped, tag = 'scoped memory for tpu_custom_call.1']
    #allocation7 [shape = 'u8[512]{0}', space=smem, size = 0x200, scoped, tag = 'input window, operand 2, single buffered']
    #allocation8 [shape = 'u8[512]{0}', space=smem, size = 0x200, scoped, tag = 'input window, operand 3, single buffered']
    #allocation9 [shape = 's32[1]{0}', space=sflag, size = 0x4, scoped, tag = 'scoped memory for tpu_custom_call.1']
    #allocation10 [shape = 'u8[512]{0}', space=vmem, size = 0x400, scoped, tag = 'output window, operand 0, single buffered']
    %11 = vsyncpa [#allocation4], 0
    %12 = vsyncpa [#allocation6], 0
    %13 = vsyncpa [#allocation9], 0
    %14 = vsyncpa [#allocation5], 0
    // Predicated region
    $region2: #{tpu_custom_call.1} parent=1 // pred_check
      _
    $region3: #{tpu_custom_call.1} parent=1 // pred_check_branch
      %16 = sbr.rel (0) target = $region5
    $region4: #{tpu_custom_call.1} parent=1 // pred_region
      %18 = vsyncadd [#allocation4], 0
      %s20 = sshll.u32 %s0, 4
      %s21 = int_to_ptr.hbm [resolvable:$true] %s20
      %s22 = sshll.u32 [#allocation3], 4
      %s23 = int_to_ptr.vmem [resolvable:$true] %s22
      %25 = dma.hbm_to_vmem [thread:$0]  %s21, 64, %s23, [#allocation4]
    $region5: #{tpu_custom_call.1} parent=1 // pred_fallthru
      _
    // Predicated region
    $region6: #{tpu_custom_call.1} parent=1 // pred_check
      _
    $region7: #{tpu_custom_call.1} parent=1 // pred_check_branch
      %27 = sbr.rel (0) target = $region9
    $region8: #{tpu_custom_call.1} parent=1 // pred_region
      _
    $region9: #{tpu_custom_call.1} parent=1 // pred_fallthru
      _
    // Predicated region
    $region10: #{tpu_custom_call.1} parent=1 // pred_check
      _
    $region11: #{tpu_custom_call.1} parent=1 // pred_check_branch
      %29 = sbr.rel (0) target = $region13
    $region12: #{tpu_custom_call.1} parent=1 // pred_region
      %31 = vsyncadd [#allocation6], 0
      %s33 = sshll.u32 %s2, 4
      %s34 = int_to_ptr.vmem [resolvable:$true] %s33
      %36 = dma.vmem_to_smem %s34, 16, [#allocation7], [#allocation6]
    $region13: #{tpu_custom_call.1} parent=1 // pred_fallthru
      _
    // Predicated region
    $region14: #{tpu_custom_call.1} parent=1 // pred_check
      _
    $region15: #{tpu_custom_call.1} parent=1 // pred_check_branch
      %38 = sbr.rel (0) target = $region17
    $region16: #{tpu_custom_call.1} parent=1 // pred_region
      %40 = vsyncadd [#allocation9], 0
      %s42 = sshll.u32 %s3, 4
      %s43 = int_to_ptr.vmem [resolvable:$true] %s42
      %45 = dma.vmem_to_smem %s43, 16, [#allocation8], [#allocation9]
    $region17: #{tpu_custom_call.1} parent=1 // pred_fallthru
      _
    // Predicated region
    $region18: #{tpu_custom_call.1} parent=1 // pred_check
      _
    $region19: #{tpu_custom_call.1} parent=1 // pred_check_branch
      %47 = sbr.rel (0) target = $region21
    $region20: #{tpu_custom_call.1} parent=1 // pred_region
      _
    $region21: #{tpu_custom_call.1} parent=1 // pred_fallthru
      _
    // Predicated region
    $region22: #{tpu_custom_call.1} parent=1 // pred_check
      _
    $region23: #{tpu_custom_call.1} parent=1 // pred_check_branch
      %49 = sbr.rel (0) target = $region25
    $region24: #{tpu_custom_call.1} parent=1 // pred_region
      %51 = dma.done [#allocation4], 64
    $region25: #{tpu_custom_call.1} parent=1 // pred_fallthru
      _
    // Predicated region
    $region26: #{tpu_custom_call.1} parent=1 // pred_check
      _
    $region27: #{tpu_custom_call.1} parent=1 // pred_check_branch
      %53 = sbr.rel (0) target = $region29
    $region28: #{tpu_custom_call.1} parent=1 // pred_region
      %55 = dma.done [#allocation6], 16
    $region29: #{tpu_custom_call.1} parent=1 // pred_fallthru
      _
    // Predicated region
    $region30: #{tpu_custom_call.1} parent=1 // pred_check
      _
    $region31: #{tpu_custom_call.1} parent=1 // pred_check_branch
      %57 = sbr.rel (0) target = $region33
    $region32: #{tpu_custom_call.1} parent=1 // pred_region
      %59 = dma.done [#allocation9], 16
    $region33: #{tpu_custom_call.1} parent=1 // pred_fallthru
      _
    %60 = sfence
    %v61 = vld [vmem:[#allocation3] sm:$0xf]
    %v62 = vld [vmem:[%s1] sm:$0x3]
    %63 = vmatpush.xpose.msra.mxu0 0.0
    %64 = vmatpush.xpose.msra.mxu0 0.0
    %65 = vmatpush.xpose.msra.mxu0 0.0
    %66 = vmatpush.xpose.msra.mxu0 0.0
    %67 = vmatpush.xpose.msra.mxu0 0.0
    %68 = vmatpush.xpose.msra.mxu0 0.0
    %69 = vmatpush.xpose.msra.mxu0 0.0
    %70 = vmatpush.xpose.msra.mxu0 0.0
    %71 = vmatpush.xpose.msra.mxu0 0.0
    %72 = vmatpush.xpose.msra.mxu0 0.0
    %73 = vmatpush.xpose.msra.mxu0 0.0
    %74 = vmatpush.xpose.msra.mxu0 0.0
    %75 = vmatpush.xpose.msra.mxu0 0.0
    %76 = vmatpush.xpose.msra.mxu0 0.0
    %77 = vmatpush.xpose.msra.mxu0 0.0
    %78 = vmatpush.xpose.msra.mxu0 %v61
    %79 = vmatmul.f32.gmra.mxu0 %v62
    %v80 = vpop.f32.mrf.mxu0
    %v81 = vadd.f32 0.0, %v80
    %82 = vdwg.mxu0
    %s83 = sld [smem:[#allocation7]]
    %v84 = vstv %s83
    %v85 = vadd.f32 %v81, %v84
    %v86 = vmax.f32 %v85, 0.0
    %s87 = sld [smem:[#allocation7 + $0x1]]
    %v88 = vstv %s87
    %v89 = vadd.f32 %v81, %v88
    %v90 = vmax.f32 %v89, 0.0
    %s91 = sld [smem:[#allocation8]]
    %v92 = vstv %s91
    %v93 = vmul.f32 %v86, %v92
    %s94 = sld [smem:[#allocation8 + $0x1]]
    %v95 = vstv %s94
    %v96 = vmul.f32 %v90, %v95
    %v98 = vrot.slane %v96, 1
    %v100 = vadd.f32 %v93, %v98
    %s101 = sld [smem:[#allocation2]]
    %v102 = vstv %s101
    %v103 = vadd.f32 %v100, %v102
    %v104 = vand.u32 2147483647, %v103
    %v105 = vsub.f32 0.0, %v104
    %v106 = vmul.f32 %v105, 1.442695
    %v107 = vpow.pop %v106
    %vm108 = vcmp.ge.f32.partialorder %v103, 0.0
    %v109 = vadd.f32 %v107, 1.0
    %v110 = vrcp.pop %v109
    %v111 = vmul.f32 %v109, %v110
    %v112 = vsub.f32 1.0, %v111
    %v113 = vmul.f32 %v110, %v112
    %v114 = vadd.f32 %v110, %v113
    %vm115 = vweird.f32 %v109
    %vm116 = vweird.f32 %v110
    %vm117 = vmor %vm115, %vm116
    %v118 = vsel %vm117, %v110, %v114
    %v119 = vand.u32 2147483647, %v109
    %vm120 = vcmp.eq.f32.partialorder %v119, 8.507059e+37
    %v121 = vand.u32 %v109, 2147483648
    %v122 = vor.u32 1.1754944e-38, %v121
    %v123 = vsel %vm120, %v122, %v118
    %v124 = vmul.f32 1.0, %v123
    %v125 = vmul.f32 %v107, %v123
    %v126 = vsel %vm108, %v124, %v125
    %vm127 = vcmask 24576
    %128 = vst.msk [vmem:[#allocation10] sm:$0x1] %vm127, %v126
    // Predicated region
    $region34: #{tpu_custom_call.1} parent=1 // pred_check
      _
    $region35: #{tpu_custom_call.1} parent=1 // pred_check_branch
      %130 = sbr.rel (0) target = $region37
    $region36: #{tpu_custom_call.1} parent=1 // pred_region
      %132 = vsyncadd [#allocation5], 0
      %s134 = sshll.u32 [#allocation10], 4
      %s135 = int_to_ptr.vmem [resolvable:$true] %s134
      %s136 = sshll.u32 %s5, 4
      %s137 = int_to_ptr.hbm [resolvable:$true] %s136
      %139 = dma.vmem_to_hbm [thread:$0]  %s135, 16, %s137, [#allocation5]
    $region37: #{tpu_custom_call.1} parent=1 // pred_fallthru
      _
    // Predicated region
    $region38: #{tpu_custom_call.1} parent=1 // pred_check
      _
    $region39: #{tpu_custom_call.1} parent=1 // pred_check_branch
      %141 = sbr.rel (0) target = $region41
    $region40: #{tpu_custom_call.1} parent=1 // pred_region
      %143 = dma.done [#allocation5], 16
    $region41: #{tpu_custom_call.1} parent=1 // pred_fallthru
      _
    %144 = vsyncpa [#allocation4], 1
    %145 = vsyncpa [#allocation5], 1
    %146 = vsyncpa [#allocation6], 1
    %147 = vsyncpa [#allocation9], 1

</llo_original>
